<compile_context>
chip_gen: v6e
topology: v6e:2x2x1
jax: 0.10.0
libtpu: 0.0.40
codegen_flags: <defaults>
</compile_context>

<pallas_src>
import jax
import jax.numpy as jnp
from jax.experimental import pallas as pl
from jax.experimental.pallas import tpu as pltpu


def gcn_kernel(adj_ref, dinv_ref, x_ref, wm_ref, ws_ref, b_ref, o_ref):
    bt, n, d_in = x_ref.shape
    d_out = wm_ref.shape[1]

    x = x_ref[...]                                     # (Bt, N, d_in) f32
    dinv = dinv_ref[...]                               # (Bt, N, 1)   f32, deg^-0.5 (inf -> 0)

    # src-side normalization, then per-window neighbor aggregation (copy_u + sum).
    feat_src = x * dinv                                # (Bt, N, d_in)
    rst = jnp.einsum("bij,bjk->bik", adj_ref[...], feat_src,
                     preferred_element_type=jnp.float32)            # (Bt, N, d_in)
    rst = rst * dinv                                   # dst-side rescale

    # Fold the window axis into M for the shared-weight GEMMs (no lane-axis concat:
    # two accumulating matmuls), single combined bias.
    rst2d = rst.reshape(bt * n, d_in)
    x2d = x.reshape(bt * n, d_in)
    out = (jnp.dot(rst2d, wm_ref[...], preferred_element_type=jnp.float32)
           + jnp.dot(x2d, ws_ref[...], preferred_element_type=jnp.float32)
           + b_ref[...])                               # (Bt*N, d_out) f32

    # Pack the Bt windows along the lane axis of the output block -> lane-dense writeback.
    for b in range(bt):                                # static unroll
        o_ref[:, b * d_out:(b + 1) * d_out] = out[b * n:(b + 1) * n, :]


def _pick_window_tile(B, d_out):
    """Windows per grid step: prefer a lane-dense (Bt*d_out % 128 == 0) output slab; among those,
    prefer leaving >= 2 grid steps (v7x megacore sharding); otherwise take the biggest tile."""
    divisors = [bt for bt in range(1, B + 1) if B % bt == 0]
    lane_dense = [bt for bt in divisors if (bt * d_out) % 128 == 0]
    pool = lane_dense if lane_dense else divisors
    multi_step = [bt for bt in pool if B // bt >= 2]
    return max(multi_step) if multi_step else max(pool)


def windows_gcn_layer(adj, feats, w_skip, b_skip, w_msg, b_msg, window_tile=None):
    """Batched windows.
      adj:   [B, N, N] float, adj[b, dst, src] = 1.0 if edge src->dst in window b
      feats: [B, N, d_in]
      w_*:   [d_out, d_in] (torch nn.Linear layout), b_*: [d_out]
    returns [B, N, d_out] float32.
    """
    B, N, d_in = feats.shape
    d_out = w_msg.shape[0]

    adj = adj.astype(jnp.float32)
    feats = feats.astype(jnp.float32)

    # dinv precomputed in the wrapper (cheap XLA column reduce) -> adjacency ships to the kernel once.
    deg = jnp.sum(adj, axis=1)                                         # out-degree per src  [B, N]
    dinv = jnp.where(deg > 0.0, 1.0 / jnp.sqrt(deg), 0.0).reshape(B, N, 1).astype(jnp.float32)

    bt = window_tile if window_tile is not None else _pick_window_tile(B, d_out)
    assert B % bt == 0, "window_tile must divide the number of windows"
    num_steps = B // bt

    wm_t = jnp.transpose(w_msg).astype(jnp.float32)                    # [d_in, d_out]
    ws_t = jnp.transpose(w_skip).astype(jnp.float32)                   # [d_in, d_out]
    b_cat = (b_msg + b_skip).reshape(1, d_out).astype(jnp.float32)     # combined bias

    packed = pl.pallas_call(
        gcn_kernel,
        out_shape=jax.ShapeDtypeStruct((num_steps, N, bt * d_out), jnp.float32),
        grid=(num_steps,),
        in_specs=[
            pl.BlockSpec((bt, N, N), lambda s: (s, 0, 0)),             # Bt adjacencies per step
            pl.BlockSpec((bt, N, 1), lambda s: (s, 0, 0)),             # Bt dinv columns per step
            pl.BlockSpec((bt, N, d_in), lambda s: (s, 0, 0)),          # Bt feature blocks per step
            pl.BlockSpec((d_in, d_out), lambda s: (0, 0)),             # shared W_msg^T
            pl.BlockSpec((d_in, d_out), lambda s: (0, 0)),             # shared W_skip^T
            pl.BlockSpec((1, d_out), lambda s: (0, 0)),                # shared combined bias
        ],
        out_specs=pl.BlockSpec((None, N, bt * d_out), lambda s: (s, 0, 0)),  # lane-dense slab
        compiler_params=pltpu.CompilerParams(dimension_semantics=("parallel",)),
    )(adj, dinv, feats, wm_t, ws_t, b_cat)

    # Unpack the lane-packed slab back to [B, N, d_out] (cheap XLA layout plumbing).
    out = packed.reshape(num_steps, N, bt, d_out)
    out = jnp.transpose(out, (0, 2, 1, 3)).reshape(B, N, d_out)
    return out


def _reference(adj, feats, w_skip, b_skip, w_msg, b_msg):
    """Pure-JAX f32 reference (batched), matching the PyTorch forward."""
    hi = jax.lax.Precision.HIGHEST
    deg = jnp.sum(adj, axis=1)                                          # out-degree per src
    dinv = jnp.where(deg > 0.0, 1.0 / jnp.sqrt(deg), 0.0)[..., None]    # [B, N, 1]
    fs = feats * dinv
    rst = jnp.einsum("bij,bjk->bik", adj, fs, precision=hi)
    rst = rst * dinv
    rst_ = jnp.einsum("bnd,od->bno", rst, w_msg, precision=hi) + b_msg
    skip = jnp.einsum("bnd,od->bno", feats, w_skip, precision=hi) + b_skip
    return rst_ + skip


if __name__ == "__main__":
    key = jax.random.PRNGKey(0)
    B, N, d_in, d_out = 4, 16, 32, 32                                   # small shapes per the module

    k_feat, k_skip, k_msg = jax.random.split(key, 3)
    feats = jax.random.normal(k_feat, (B, N, d_in), dtype=jnp.float32)

    # Deterministic directed graphs per window: self-loops + ring i->(i+1)%N + ring i->(i+2+b)%N.
    src = jnp.arange(N)
    adj_list = []
    for b in range(B):
        a = jnp.zeros((N, N), jnp.float32)
        a = a.at[(src + 1) % N, src].set(1.0)
        a = a.at[(src + 2 + b) % N, src].set(1.0)
        a = a.at[src, src].set(1.0)
        adj_list.append(a)
    adj = jnp.stack(adj_list, axis=0)                                   # [B, N, N]

    # Parameters per reset_parameters(): xavier_normal (gain=relu=sqrt(2)), biases = 0.
    gain = jnp.sqrt(2.0)
    std = gain * jnp.sqrt(2.0 / (d_in + d_out))
    linear_skip_weight = std * jax.random.normal(k_skip, (d_out, d_in), dtype=jnp.float32)
    linear_msg_weight = std * jax.random.normal(k_msg, (d_out, d_in), dtype=jnp.float32)
    linear_skip_bias = jnp.zeros((d_out,), jnp.float32)
    linear_msg_bias = jnp.zeros((d_out,), jnp.float32)

    out = windows_gcn_layer(adj, feats, linear_skip_weight, linear_skip_bias,
                            linear_msg_weight, linear_msg_bias)
    out = jax.block_until_ready(out)

    expected = _reference(adj, feats, linear_skip_weight, linear_skip_bias,
                          linear_msg_weight, linear_msg_bias)
    assert out.shape == (B, N, d_out)
    # Kernel is full f32 on the MXU now -> tight tolerance vs. the highest-precision reference.
    assert jnp.allclose(out, expected, atol=1e-3, rtol=1e-3), "mismatch vs reference"
    print("KERNEL_OK")
</pallas_src>

<mosaic_0001>
module attributes {stable_mosaic.version = 11 : i64} {
  func.func @gcn_kernel(%arg0: i32, %arg1: memref<4x16x16xf32, #tpu.memory_space<vmem>>, %arg2: memref<4x16x1xf32, #tpu.memory_space<vmem>>, %arg3: memref<4x16x32xf32, #tpu.memory_space<vmem>>, %arg4: memref<32x32xf32, #tpu.memory_space<vmem>>, %arg5: memref<32x32xf32, #tpu.memory_space<vmem>>, %arg6: memref<1x32xf32, #tpu.memory_space<vmem>>, %arg7: memref<1x16x128xf32, #tpu.memory_space<vmem>>) attributes {dimension_semantics = [#tpu.dimension_semantics<parallel>], iteration_bounds = array<i64: 1>, scalar_prefetch = 0 : i64, scratch_operands = 0 : i64, tpu.core_type = #tpu.core_type<tc>, window_params = [{transform_indices = @transform_0, window_bounds = array<i64: 4, 16, 16>}, {transform_indices = @transform_1, window_bounds = array<i64: 4, 16, 1>}, {transform_indices = @transform_2, window_bounds = array<i64: 4, 16, 32>}, {pipeline_mode = #tpu.pipeline_mode<synchronous>, transform_indices = @transform_3, window_bounds = array<i64: 32, 32>}, {pipeline_mode = #tpu.pipeline_mode<synchronous>, transform_indices = @transform_4, window_bounds = array<i64: 32, 32>}, {pipeline_mode = #tpu.pipeline_mode<synchronous>, transform_indices = @transform_5, window_bounds = array<i64: 1, 32>}, {transform_indices = @transform_6, window_bounds = array<i64: 1, 16, 128>}]} {
    %c0 = arith.constant 0 : index
    %c0_0 = arith.constant 0 : index
    %c0_1 = arith.constant 0 : index
    %0 = vector.load %arg3[%c0, %c0_0, %c0_1] : memref<4x16x32xf32, #tpu.memory_space<vmem>>, vector<4x16x32xf32>
    %c0_2 = arith.constant 0 : index
    %c0_3 = arith.constant 0 : index
    %c0_4 = arith.constant 0 : index
    %1 = vector.load %arg2[%c0_2, %c0_3, %c0_4] : memref<4x16x1xf32, #tpu.memory_space<vmem>>, vector<4x16x1xf32>
    %2 = vector.broadcast %1 : vector<4x16x1xf32> to vector<4x16x32xf32>
    %3 = arith.mulf %0, %2 : vector<4x16x32xf32>
    %c0_5 = arith.constant 0 : index
    %c0_6 = arith.constant 0 : index
    %c0_7 = arith.constant 0 : index
    %4 = vector.load %arg1[%c0_5, %c0_6, %c0_7] : memref<4x16x16xf32, #tpu.memory_space<vmem>>, vector<4x16x16xf32>
    "tpu.trace_start"() <{level = 10 : i32, message = "bij,bjk->bik"}> : () -> ()
    %cst = arith.constant dense<0.000000e+00> : vector<4x16x32xf32>
    %5 = tpu.matmul %4, %3, %cst {dimension_numbers = #tpu.dot_dimension_numbers<[2], [1], [1], [2], [0, 0, 0, 1, 1, 2], [0], [0]>} : vector<4x16x16xf32>, vector<4x16x32xf32>, vector<4x16x32xf32> -> vector<4x16x32xf32>
    "tpu.trace_stop"() : () -> ()
    %6 = vector.broadcast %1 : vector<4x16x1xf32> to vector<4x16x32xf32>
    %7 = arith.mulf %5, %6 : vector<4x16x32xf32>
    %8 = vector.shape_cast %7 : vector<4x16x32xf32> to vector<64x32xf32>
    %9 = vector.shape_cast %0 : vector<4x16x32xf32> to vector<64x32xf32>
    %c0_8 = arith.constant 0 : index
    %c0_9 = arith.constant 0 : index
    %10 = vector.load %arg4[%c0_8, %c0_9] : memref<32x32xf32, #tpu.memory_space<vmem>>, vector<32x32xf32>
    %cst_10 = arith.constant dense<0.000000e+00> : vector<64x32xf32>
    %11 = tpu.matmul %8, %10, %cst_10 {dimension_numbers = #tpu.dot_dimension_numbers<[1], [0], [0], [1], [0, 0, 1, 1], [], []>} : vector<64x32xf32>, vector<32x32xf32>, vector<64x32xf32> -> vector<64x32xf32>
    %c0_11 = arith.constant 0 : index
    %c0_12 = arith.constant 0 : index
    %12 = vector.load %arg5[%c0_11, %c0_12] : memref<32x32xf32, #tpu.memory_space<vmem>>, vector<32x32xf32>
    %cst_13 = arith.constant dense<0.000000e+00> : vector<64x32xf32>
    %13 = tpu.matmul %9, %12, %cst_13 {dimension_numbers = #tpu.dot_dimension_numbers<[1], [0], [0], [1], [0, 0, 1, 1], [], []>} : vector<64x32xf32>, vector<32x32xf32>, vector<64x32xf32> -> vector<64x32xf32>
    %14 = arith.addf %11, %13 : vector<64x32xf32>
    %c0_14 = arith.constant 0 : index
    %c0_15 = arith.constant 0 : index
    %15 = vector.load %arg6[%c0_14, %c0_15] : memref<1x32xf32, #tpu.memory_space<vmem>>, vector<1x32xf32>
    %16 = vector.broadcast %15 : vector<1x32xf32> to vector<64x32xf32>
    %17 = arith.addf %14, %16 : vector<64x32xf32>
    %18 = vector.extract_strided_slice %17 {offsets = [0, 0], sizes = [16, 32], strides = [1, 1]} : vector<64x32xf32> to vector<16x32xf32>
    %c0_16 = arith.constant 0 : index
    %c0_17 = arith.constant 0 : index
    %c0_18 = arith.constant 0 : index
    %19 = vector.load %arg7[%c0_16, %c0_17, %c0_18] : memref<1x16x128xf32, #tpu.memory_space<vmem>>, vector<1x16x32xf32>
    %20 = vector.shape_cast %19 : vector<1x16x32xf32> to vector<16x32xf32>
    %21 = vector.shape_cast %18 : vector<16x32xf32> to vector<1x16x32xf32>
    tpu.vector_store %arg7[%c0_16, %c0_17, %c0_18], %21 {strides = array<i32>} : memref<1x16x128xf32, #tpu.memory_space<vmem>>, vector<1x16x32xf32>,
    %22 = vector.extract_strided_slice %17 {offsets = [16, 0], sizes = [16, 32], strides = [1, 1]} : vector<64x32xf32> to vector<16x32xf32>
    %c0_19 = arith.constant 0 : index
    %c0_20 = arith.constant 0 : index
    %c32 = arith.constant 32 : index
    %23 = vector.load %arg7[%c0_19, %c0_20, %c32] : memref<1x16x128xf32, #tpu.memory_space<vmem>>, vector<1x16x32xf32>
    %24 = vector.shape_cast %23 : vector<1x16x32xf32> to vector<16x32xf32>
    %25 = vector.shape_cast %22 : vector<16x32xf32> to vector<1x16x32xf32>
    tpu.vector_store %arg7[%c0_19, %c0_20, %c32], %25 {strides = array<i32>} : memref<1x16x128xf32, #tpu.memory_space<vmem>>, vector<1x16x32xf32>,
    %26 = vector.extract_strided_slice %17 {offsets = [32, 0], sizes = [16, 32], strides = [1, 1]} : vector<64x32xf32> to vector<16x32xf32>
    %c0_21 = arith.constant 0 : index
    %c0_22 = arith.constant 0 : index
    %c64 = arith.constant 64 : index
    %27 = vector.load %arg7[%c0_21, %c0_22, %c64] : memref<1x16x128xf32, #tpu.memory_space<vmem>>, vector<1x16x32xf32>
    %28 = vector.shape_cast %27 : vector<1x16x32xf32> to vector<16x32xf32>
    %29 = vector.shape_cast %26 : vector<16x32xf32> to vector<1x16x32xf32>
    tpu.vector_store %arg7[%c0_21, %c0_22, %c64], %29 {strides = array<i32>} : memref<1x16x128xf32, #tpu.memory_space<vmem>>, vector<1x16x32xf32>,
    %30 = vector.extract_strided_slice %17 {offsets = [48, 0], sizes = [16, 32], strides = [1, 1]} : vector<64x32xf32> to vector<16x32xf32>
    %c0_23 = arith.constant 0 : index
    %c0_24 = arith.constant 0 : index
    %c96 = arith.constant 96 : index
    %31 = vector.load %arg7[%c0_23, %c0_24, %c96] : memref<1x16x128xf32, #tpu.memory_space<vmem>>, vector<1x16x32xf32>
    %32 = vector.shape_cast %31 : vector<1x16x32xf32> to vector<16x32xf32>
    %33 = vector.shape_cast %30 : vector<16x32xf32> to vector<1x16x32xf32>
    tpu.vector_store %arg7[%c0_23, %c0_24, %c96], %33 {strides = array<i32>} : memref<1x16x128xf32, #tpu.memory_space<vmem>>, vector<1x16x32xf32>,
    return
  }
  func.func @transform_0(%arg0: i32) -> (i32, i32, i32) {
    %c0_i32 = arith.constant 0 : i32
    %c0_i32_0 = arith.constant 0 : i32
    %c0_i32_1 = arith.constant 0 : i32
    return %arg0, %c0_i32, %c0_i32_0 : i32, i32, i32
  }
  func.func @transform_1(%arg0: i32) -> (i32, i32, i32) {
    %c0_i32 = arith.constant 0 : i32
    %c0_i32_0 = arith.constant 0 : i32
    %c0_i32_1 = arith.constant 0 : i32
    return %arg0, %c0_i32, %c0_i32_0 : i32, i32, i32
  }
  func.func @transform_2(%arg0: i32) -> (i32, i32, i32) {
    %c0_i32 = arith.constant 0 : i32
    %c0_i32_0 = arith.constant 0 : i32
    %c0_i32_1 = arith.constant 0 : i32
    return %arg0, %c0_i32, %c0_i32_0 : i32, i32, i32
  }
  func.func @transform_3(%arg0: i32) -> (i32, i32) {
    %c0_i32 = arith.constant 0 : i32
    %c0_i32_0 = arith.constant 0 : i32
    %c0_i32_1 = arith.constant 0 : i32
    return %c0_i32, %c0_i32_0 : i32, i32
  }
  func.func @transform_4(%arg0: i32) -> (i32, i32) {
    %c0_i32 = arith.constant 0 : i32
    %c0_i32_0 = arith.constant 0 : i32
    %c0_i32_1 = arith.constant 0 : i32
    return %c0_i32, %c0_i32_0 : i32, i32
  }
  func.func @transform_5(%arg0: i32) -> (i32, i32) {
    %c0_i32 = arith.constant 0 : i32
    %c0_i32_0 = arith.constant 0 : i32
    %c0_i32_1 = arith.constant 0 : i32
    return %c0_i32, %c0_i32_0 : i32, i32
  }
  func.func @transform_6(%arg0: i32) -> (i32, i32, i32) {
    %c0_i32 = arith.constant 0 : i32
    %c0_i32_0 = arith.constant 0 : i32
    %c0_i32_1 = arith.constant 0 : i32
    return %arg0, %c0_i32, %c0_i32_0 : i32, i32, i32
  }
}

</mosaic_0001>

<llo_original>
// kernel: tpu_custom_call.1
$region0: #{tpu_custom_call.1}
  #allocation0 [shape = 'u32[]', space=smem, size = 0x4, offset = 0x4, fixed_abs, tag = 'smem constant byte address 0x4 - core index']
  #allocation1 [shape = 'u32[144,128]{1,0:T(1,128)}', space=vmem, size = 0x12000, scoped, tag = 'internal scratch']
  %s0 = inlined_call_operand.vmem [shape: f32[4,16,16], index: 0, kind: input, shape index: {}]
  %s1 = inlined_call_operand.vmem [shape: f32[4,16,1], index: 1, kind: input, shape index: {}]
  %s2 = inlined_call_operand.hbm [shape: f32[4,16,32], index: 2, kind: input, shape index: {}]
  %s3 = inlined_call_operand.hbm [shape: f32[32,32], index: 3, kind: input, shape index: {}]
  %s4 = inlined_call_operand.hbm [shape: f32[32,32], index: 4, kind: input, shape index: {}]
  %s5 = inlined_call_operand.vmem [shape: f32[1,32], index: 5, kind: input, shape index: {}]
  %s6 = inlined_call_operand.hbm [shape: f32[1,16,128], index: 6, kind: output, shape index: {}]
  %s7 = sld [smem:[#allocation0]]
  $region46: #{tpu_custom_call.1} parent=0
    _
  %s9 = ssub.s32 1, %s7
  %s10 = scalar_select 0, %s9, %s7
  $region1: #{tpu_custom_call.1} parent=0
    #allocation2 [shape = 'u8[32768]{0}', space=vmem, size = 0x8000, scoped, tag = 'input window, operand 2, single buffered']
    #allocation3 [shape = 's32[1]{0}', space=sflag, size = 0x4, scoped, tag = 'scoped memory for tpu_custom_call.1']
    #allocation4 [shape = 's32[1]{0}', space=sflag, size = 0x4, scoped, tag = 'scoped memory for tpu_custom_call.1']
    #allocation5 [shape = 'u8[16384]{0}', space=vmem, size = 0x4000, scoped, tag = 'input window, operand 3, single buffered']
    #allocation6 [shape = 's32[1]{0}', space=sflag, size = 0x4, scoped, tag = 'scoped memory for tpu_custom_call.1']
    #allocation7 [shape = 'u8[16384]{0}', space=vmem, size = 0x4000, scoped, tag = 'input window, operand 4, single buffered']
    #allocation8 [shape = 'u8[8192]{0}', space=vmem, size = 0x2000, scoped, tag = 'output window, operand 0, single buffered']
    %11 = vsyncpa [#allocation3], 0
    %12 = vsyncpa [#allocation6], 0
    %13 = vsyncpa [#allocation4], 0
    // Predicated region
    $region2: #{tpu_custom_call.1} parent=1 // pred_check
      _
    $region3: #{tpu_custom_call.1} parent=1 // pred_check_branch
      %15 = sbr.rel (0) target = $region5
    $region4: #{tpu_custom_call.1} parent=1 // pred_region
      _
    $region5: #{tpu_custom_call.1} parent=1 // pred_fallthru
      _
    // Predicated region
    $region6: #{tpu_custom_call.1} parent=1 // pred_check
      _
    $region7: #{tpu_custom_call.1} parent=1 // pred_check_branch
      %17 = sbr.rel (0) target = $region9
    $region8: #{tpu_custom_call.1} parent=1 // pred_region
      _
    $region9: #{tpu_custom_call.1} parent=1 // pred_fallthru
      _
    // Predicated region
    $region10: #{tpu_custom_call.1} parent=1 // pred_check
      _
    $region11: #{tpu_custom_call.1} parent=1 // pred_check_branch
      %19 = sbr.rel (0) target = $region13
    $region12: #{tpu_custom_call.1} parent=1 // pred_region
      %s21 = ssub.s32 1024, 1024
      %22 = vsyncadd [#allocation3], %s21
      %s23 = sshll.u32 [#allocation2], 4
      %s24 = int_to_ptr.vmem [resolvable:$true] %s23
      %29 = dma.hbm_to_vmem [thread:$0]  %s2, 1024, %s24, [#allocation3], 128, 128, 8
    $region13: #{tpu_custom_call.1} parent=1 // pred_fallthru
      _
    // Predicated region
    $region14: #{tpu_custom_call.1} parent=1 // pred_check
      _
    $region15: #{tpu_custom_call.1} parent=1 // pred_check_branch
      %31 = sbr.rel (0) target = $region17
    $region16: #{tpu_custom_call.1} parent=1 // pred_region
      %s33 = ssub.s32 512, 512
      %34 = vsyncadd [#allocation6], %s33
      %s35 = sshll.u32 [#allocation5], 4
      %s36 = int_to_ptr.vmem [resolvable:$true] %s35
      %41 = dma.hbm_to_vmem [thread:$0]  %s3, 512, %s36, [#allocation6], 128, 128, 8
    $region17: #{tpu_custom_call.1} parent=1 // pred_fallthru
      _
    // Predicated region
    $region18: #{tpu_custom_call.1} parent=1 // pred_check
      _
    $region19: #{tpu_custom_call.1} parent=1 // pred_check_branch
      %43 = sbr.rel (0) target = $region21
    $region20: #{tpu_custom_call.1} parent=1 // pred_region
      %s45 = ssub.s32 512, 512
      %46 = vsyncadd [#allocation6], %s45
      %s47 = sshll.u32 [#allocation7], 4
      %s48 = int_to_ptr.vmem [resolvable:$true] %s47
      %53 = dma.hbm_to_vmem [thread:$0]  %s4, 512, %s48, [#allocation6], 128, 128, 8
    $region21: #{tpu_custom_call.1} parent=1 // pred_fallthru
      _
    // Predicated region
    $region22: #{tpu_custom_call.1} parent=1 // pred_check
      _
    $region23: #{tpu_custom_call.1} parent=1 // pred_check_branch
      %55 = sbr.rel (0) target = $region25
    $region24: #{tpu_custom_call.1} parent=1 // pred_region
      _
    $region25: #{tpu_custom_call.1} parent=1 // pred_fallthru
      _
    // Predicated region
    $region26: #{tpu_custom_call.1} parent=1 // pred_check
      _
    $region27: #{tpu_custom_call.1} parent=1 // pred_check_branch
      %57 = sbr.rel (0) target = $region29
    $region28: #{tpu_custom_call.1} parent=1 // pred_region
      %58 = dma.done [#allocation3], 1024
    $region29: #{tpu_custom_call.1} parent=1 // pred_fallthru
      _
    // Predicated region
    $region30: #{tpu_custom_call.1} parent=1 // pred_check
      _
    $region31: #{tpu_custom_call.1} parent=1 // pred_check_branch
      %60 = sbr.rel (0) target = $region33
    $region32: #{tpu_custom_call.1} parent=1 // pred_region
      %61 = dma.done [#allocation6], 512
    $region33: #{tpu_custom_call.1} parent=1 // pred_fallthru
      _
    // Predicated region
    $region34: #{tpu_custom_call.1} parent=1 // pred_check
      _
    $region35: #{tpu_custom_call.1} parent=1 // pred_check_branch
      %63 = sbr.rel (0) target = $region37
    $region36: #{tpu_custom_call.1} parent=1 // pred_region
      %64 = dma.done [#allocation6], 512
    $region37: #{tpu_custom_call.1} parent=1 // pred_fallthru
      _
    %v65 = vld [vmem:[#allocation2] sm:$0xff]
    %v66 = vld [vmem:[#allocation2 + $0x8] sm:$0xff]
    %v67 = vld [vmem:[#allocation2 + $0x10] sm:$0xff]
    %v68 = vld [vmem:[#allocation2 + $0x18] sm:$0xff]
    %v69 = vld [vmem:[#allocation2 + $0x20] sm:$0xff]
    %v70 = vld [vmem:[#allocation2 + $0x28] sm:$0xff]
    %v71 = vld [vmem:[#allocation2 + $0x30] sm:$0xff]
    %v72 = vld [vmem:[#allocation2 + $0x38] sm:$0xff]
    %v73 = vld [vmem:[%s1] sm:$0xff]
    %v74 = vld [vmem:[%s1 + $0x8] sm:$0xff]
    %v75 = vld [vmem:[%s1 + $0x10] sm:$0xff]
    %v76 = vld [vmem:[%s1 + $0x18] sm:$0xff]
    %v77 = vld [vmem:[%s1 + $0x20] sm:$0xff]
    %v78 = vld [vmem:[%s1 + $0x28] sm:$0xff]
    %v79 = vld [vmem:[%s1 + $0x30] sm:$0xff]
    %v80 = vld [vmem:[%s1 + $0x38] sm:$0xff]
    %82 = vset.pattern.permute.xlu0 0
    %83 = vperm.xlu0 %82, %v73
    %v84 = vpop.permute.xlu0 %83
    %87 = vset.pattern.permute.xlu0 0
    %88 = vperm.xlu0 %87, %v74
    %v89 = vpop.permute.xlu0 %88
    %92 = vset.pattern.permute.xlu0 0
    %93 = vperm.xlu0 %92, %v75
    %v94 = vpop.permute.xlu0 %93
    %97 = vset.pattern.permute.xlu0 0
    %98 = vperm.xlu0 %97, %v76
    %v99 = vpop.permute.xlu0 %98
    %102 = vset.pattern.permute.xlu0 0
    %103 = vperm.xlu0 %102, %v77
    %v104 = vpop.permute.xlu0 %103
    %107 = vset.pattern.permute.xlu0 0
    %108 = vperm.xlu0 %107, %v78
    %v109 = vpop.permute.xlu0 %108
    %112 = vset.pattern.permute.xlu0 0
    %113 = vperm.xlu0 %112, %v79
    %v114 = vpop.permute.xlu0 %113
    %117 = vset.pattern.permute.xlu0 0
    %118 = vperm.xlu0 %117, %v80
    %v119 = vpop.permute.xlu0 %118
    %v121 = vmul.f32 %v65, %v84
    %v122 = vmul.f32 %v66, %v89
    %v123 = vmul.f32 %v67, %v94
    %v124 = vmul.f32 %v68, %v99
    %v125 = vmul.f32 %v69, %v104
    %v126 = vmul.f32 %v70, %v109
    %v127 = vmul.f32 %v71, %v114
    %v128 = vmul.f32 %v72, %v119
    %v129 = vld [vmem:[%s0] sm:$0xff]
    %v130 = vld [vmem:[%s0 + $0x8] sm:$0xff]
    %v131 = vld [vmem:[%s0 + $0x10] sm:$0xff]
    %v132 = vld [vmem:[%s0 + $0x18] sm:$0xff]
    %v133 = vld [vmem:[%s0 + $0x20] sm:$0xff]
    %v134 = vld [vmem:[%s0 + $0x28] sm:$0xff]
    %v135 = vld [vmem:[%s0 + $0x30] sm:$0xff]
    %v136 = vld [vmem:[%s0 + $0x38] sm:$0xff]
    %vm137 = vcmask 130048
    %v139 = vsel %vm137, %v129, 0
    %v142 = vsel %vm137, %v130, 0
    %144 = vmatprep.subr.mxu0 0.0
    %145 = vmatpush1.msra.mxu0 0.0
    %146 = vmatprep.subr.mxu0 0.0
    %147 = vmatpush1.msra.mxu0 0.0
    %148 = vmatprep.subr.mxu0 0.0
    %149 = vmatpush1.msra.mxu0 0.0
    %150 = vmatprep.subr.mxu0 0.0
    %151 = vmatpush1.msra.mxu0 0.0
    %152 = vmatprep.subr.mxu0 0.0
    %153 = vmatpush1.msra.mxu0 0.0
    %154 = vmatprep.subr.mxu0 0.0
    %155 = vmatpush1.msra.mxu0 0.0
    %156 = vmatprep.subr.mxu0 0.0
    %157 = vmatpush1.msra.mxu0 0.0
    %158 = vmatprep.subr.mxu0 0.0
    %159 = vmatpush1.msra.mxu0 0.0
    %160 = vmatprep.subr.mxu0 0.0
    %161 = vmatpush1.msra.mxu0 0.0
    %162 = vmatprep.subr.mxu0 0.0
    %163 = vmatpush1.msra.mxu0 0.0
    %164 = vmatprep.subr.mxu0 0.0
    %165 = vmatpush1.msra.mxu0 0.0
    %166 = vmatprep.subr.mxu0 0.0
    %167 = vmatpush1.msra.mxu0 0.0
    %168 = vmatprep.subr.mxu0 0.0
    %169 = vmatpush1.msra.mxu0 0.0
    %170 = vmatprep.subr.mxu0 0.0
    %171 = vmatpush1.msra.mxu0 0.0
    %172 = vmatprep.subr.mxu0 0.0
    %173 = vmatpush1.msra.mxu0 %v122
    %174 = vmatprep.subr.mxu0 0.0
    %175 = vmatpush1.msra.mxu0 %v121
    %176 = vmatprep.subr.mxu0 0.0
    %177 = vmatpush2.msra.mxu0 0.0
    %178 = vmatprep.subr.mxu0 0.0
    %179 = vmatpush2.msra.mxu0 0.0
    %180 = vmatprep.subr.mxu0 0.0
    %181 = vmatpush2.msra.mxu0 0.0
    %182 = vmatprep.subr.mxu0 0.0
    %183 = vmatpush2.msra.mxu0 0.0
    %184 = vmatprep.subr.mxu0 0.0
    %185 = vmatpush2.msra.mxu0 0.0
    %186 = vmatprep.subr.mxu0 0.0
    %187 = vmatpush2.msra.mxu0 0.0
    %188 = vmatprep.subr.mxu0 0.0
    %189 = vmatpush2.msra.mxu0 0.0
    %190 = vmatprep.subr.mxu0 0.0
    %191 = vmatpush2.msra.mxu0 0.0
    %192 = vmatprep.subr.mxu0 0.0
    %193 = vmatpush2.msra.mxu0 0.0
    %194 = vmatprep.subr.mxu0 0.0
    %195 = vmatpush2.msra.mxu0 0.0
    %196 = vmatprep.subr.mxu0 0.0
    %197 = vmatpush2.msra.mxu0 0.0
    %198 = vmatprep.subr.mxu0 0.0
    %199 = vmatpush2.msra.mxu0 0.0
    %200 = vmatprep.subr.mxu0 0.0
    %201 = vmatpush2.msra.mxu0 0.0
    %202 = vmatprep.subr.mxu0 0.0
    %203 = vmatpush2.msra.mxu0 0.0
    %204 = vmatprep.subr.mxu0 0.0
    %205 = vmatpush2.msra.mxu0 0.0
    %206 = vmatprep.subr.mxu0 0.0
    %207 = vmatpush2.msra.mxu0 0.0
    %208 = vmatprep.mubr.f32.mxu0 0.0
    %209 = vmatmul.mubr.f32.gmra.mxu0 %v139
    %v210 = vpop.f32.mrf.mxu0
    %v211 = vadd.f32 0.0, %v210
    %v212 = vpop.f32.mrf.mxu0
    %213 = vmatprep.mubr.f32.mxu0 0.0
    %214 = vmatmul.mubr.f32.gmra.mxu0 %v142
    %v215 = vpop.f32.mrf.mxu0
    %v216 = vadd.f32 0.0, %v215
    %v217 = vpop.f32.mrf.mxu0
    %218 = vdwg.mxu0
    %v220 = vsel %vm137, %v131, 0
    %v223 = vsel %vm137, %v132, 0
    %225 = vmatprep.subr.mxu0 0.0
    %226 = vmatpush1.msra.mxu0 0.0
    %227 = vmatprep.subr.mxu0 0.0
    %228 = vmatpush1.msra.mxu0 0.0
    %229 = vmatprep.subr.mxu0 0.0
    %230 = vmatpush1.msra.mxu0 0.0
    %231 = vmatprep.subr.mxu0 0.0
    %232 = vmatpush1.msra.mxu0 0.0
    %233 = vmatprep.subr.mxu0 0.0
    %234 = vmatpush1.msra.mxu0 0.0
    %235 = vmatprep.subr.mxu0 0.0
    %236 = vmatpush1.msra.mxu0 0.0
    %237 = vmatprep.subr.mxu0 0.0
    %238 = vmatpush1.msra.mxu0 0.0
    %239 = vmatprep.subr.mxu0 0.0
    %240 = vmatpush1.msra.mxu0 0.0
    %241 = vmatprep.subr.mxu0 0.0
    %242 = vmatpush1.msra.mxu0 0.0
    %243 = vmatprep.subr.mxu0 0.0
    %244 = vmatpush1.msra.mxu0 0.0
    %245 = vmatprep.subr.mxu0 0.0
    %246 = vmatpush1.msra.mxu0 0.0
    %247 = vmatprep.subr.mxu0 0.0
    %248 = vmatpush1.msra.mxu0 0.0
    %249 = vmatprep.subr.mxu0 0.0
    %250 = vmatpush1.msra.mxu0 0.0
    %251 = vmatprep.subr.mxu0 0.0
    %252 = vmatpush1.msra.mxu0 0.0
    %253 = vmatprep.subr.mxu0 0.0
    %254 = vmatpush1.msra.mxu0 %v124
    %255 = vmatprep.subr.mxu0 0.0
    %256 = vmatpush1.msra.mxu0 %v123
    %257 = vmatprep.subr.mxu0 0.0
    %258 = vmatpush2.msra.mxu0 0.0
    %259 = vmatprep.subr.mxu0 0.0
    %260 = vmatpush2.msra.mxu0 0.0
    %261 = vmatprep.subr.mxu0 0.0
    %262 = vmatpush2.msra.mxu0 0.0
    %263 = vmatprep.subr.mxu0 0.0
    %264 = vmatpush2.msra.mxu0 0.0
    %265 = vmatprep.subr.mxu0 0.0
    %266 = vmatpush2.msra.mxu0 0.0
    %267 = vmatprep.subr.mxu0 0.0
    %268 = vmatpush2.msra.mxu0 0.0
    %269 = vmatprep.subr.mxu0 0.0
    %270 = vmatpush2.msra.mxu0 0.0
    %271 = vmatprep.subr.mxu0 0.0
    %272 = vmatpush2.msra.mxu0 0.0
    %273 = vmatprep.subr.mxu0 0.0
    %274 = vmatpush2.msra.mxu0 0.0
    %275 = vmatprep.subr.mxu0 0.0
    %276 = vmatpush2.msra.mxu0 0.0
    %277 = vmatprep.subr.mxu0 0.0
    %278 = vmatpush2.msra.mxu0 0.0
    %279 = vmatprep.subr.mxu0 0.0
    %280 = vmatpush2.msra.mxu0 0.0
    %281 = vmatprep.subr.mxu0 0.0
    %282 = vmatpush2.msra.mxu0 0.0
    %283 = vmatprep.subr.mxu0 0.0
    %284 = vmatpush2.msra.mxu0 0.0
    %285 = vmatprep.subr.mxu0 0.0
    %286 = vmatpush2.msra.mxu0 0.0
    %287 = vmatprep.subr.mxu0 0.0
    %288 = vmatpush2.msra.mxu0 0.0
    %289 = vmatprep.mubr.f32.mxu0 0.0
    %290 = vmatmul.mubr.f32.gmra.mxu0 %v220
    %v291 = vpop.f32.mrf.mxu0
    %v292 = vadd.f32 0.0, %v291
    %v293 = vpop.f32.mrf.mxu0
    %294 = vmatprep.mubr.f32.mxu0 0.0
    %295 = vmatmul.mubr.f32.gmra.mxu0 %v223
    %v296 = vpop.f32.mrf.mxu0
    %v297 = vadd.f32 0.0, %v296
    %v298 = vpop.f32.mrf.mxu0
    %299 = vdwg.mxu0
    %v301 = vsel %vm137, %v133, 0
    %v304 = vsel %vm137, %v134, 0
    %306 = vmatprep.subr.mxu0 0.0
    %307 = vmatpush1.msra.mxu0 0.0
    %308 = vmatprep.subr.mxu0 0.0
    %309 = vmatpush1.msra.mxu0 0.0
    %310 = vmatprep.subr.mxu0 0.0
    %311 = vmatpush1.msra.mxu0 0.0
    %312 = vmatprep.subr.mxu0 0.0
    %313 = vmatpush1.msra.mxu0 0.0
    %314 = vmatprep.subr.mxu0 0.0
    %315 = vmatpush1.msra.mxu0 0.0
    %316 = vmatprep.subr.mxu0 0.0
    %317 = vmatpush1.msra.mxu0 0.0
    %318 = vmatprep.subr.mxu0 0.0
    %319 = vmatpush1.msra.mxu0 0.0
    %320 = vmatprep.subr.mxu0 0.0
    %321 = vmatpush1.msra.mxu0 0.0
    %322 = vmatprep.subr.mxu0 0.0
    %323 = vmatpush1.msra.mxu0 0.0
    %324 = vmatprep.subr.mxu0 0.0
    %325 = vmatpush1.msra.mxu0 0.0
    %326 = vmatprep.subr.mxu0 0.0
    %327 = vmatpush1.msra.mxu0 0.0
    %328 = vmatprep.subr.mxu0 0.0
    %329 = vmatpush1.msra.mxu0 0.0
    %330 = vmatprep.subr.mxu0 0.0
    %331 = vmatpush1.msra.mxu0 0.0
    %332 = vmatprep.subr.mxu0 0.0
    %333 = vmatpush1.msra.mxu0 0.0
    %334 = vmatprep.subr.mxu0 0.0
    %335 = vmatpush1.msra.mxu0 %v126
    %336 = vmatprep.subr.mxu0 0.0
    %337 = vmatpush1.msra.mxu0 %v125
    %338 = vmatprep.subr.mxu0 0.0
    %339 = vmatpush2.msra.mxu0 0.0
    %340 = vmatprep.subr.mxu0 0.0
    %341 = vmatpush2.msra.mxu0 0.0
    %342 = vmatprep.subr.mxu0 0.0
    %343 = vmatpush2.msra.mxu0 0.0
    %344 = vmatprep.subr.mxu0 0.0
    %345 = vmatpush2.msra.mxu0 0.0
    %346 = vmatprep.subr.mxu0 0.0
    %347 = vmatpush2.msra.mxu0 0.0
    %348 = vmatprep.subr.mxu0 0.0
    %349 = vmatpush2.msra.mxu0 0.0
    %350 = vmatprep.subr.mxu0 0.0
    %351 = vmatpush2.msra.mxu0 0.0
    %352 = vmatprep.subr.mxu0 0.0
    %353 = vmatpush2.msra.mxu0 0.0
    %354 = vmatprep.subr.mxu0 0.0
    %355 = vmatpush2.msra.mxu0 0.0
    %356 = vmatprep.subr.mxu0 0.0
    %357 = vmatpush2.msra.mxu0 0.0
    %358 = vmatprep.subr.mxu0 0.0
    %359 = vmatpush2.msra.mxu0 0.0
    %360 = vmatprep.subr.mxu0 0.0
    %361 = vmatpush2.msra.mxu0 0.0
    %362 = vmatprep.subr.mxu0 0.0
    %363 = vmatpush2.msra.mxu0 0.0
    %364 = vmatprep.subr.mxu0 0.0
    %365 = vmatpush2.msra.mxu0 0.0
    %366 = vmatprep.subr.mxu0 0.0
    %367 = vmatpush2.msra.mxu0 0.0
    %368 = vmatprep.subr.mxu0 0.0
    %369 = vmatpush2.msra.mxu0 0.0
    %370 = vmatprep.mubr.f32.mxu0 0.0
    %371 = vmatmul.mubr.f32.gmra.mxu0 %v301
    %v372 = vpop.f32.mrf.mxu0
    %v373 = vadd.f32 0.0, %v372
    %v374 = vpop.f32.mrf.mxu0
    %375 = vmatprep.mubr.f32.mxu0 0.0
    %376 = vmatmul.mubr.f32.gmra.mxu0 %v304
    %v377 = vpop.f32.mrf.mxu0
    %v378 = vadd.f32 0.0, %v377
    %v379 = vpop.f32.mrf.mxu0
    %380 = vdwg.mxu0
    %v382 = vsel %vm137, %v135, 0
    %v385 = vsel %vm137, %v136, 0
    %387 = vmatprep.subr.mxu0 0.0
    %388 = vmatpush1.msra.mxu0 0.0
    %389 = vmatprep.subr.mxu0 0.0
    %390 = vmatpush1.msra.mxu0 0.0
    %391 = vmatprep.subr.mxu0 0.0
    %392 = vmatpush1.msra.mxu0 0.0
    %393 = vmatprep.subr.mxu0 0.0
    %394 = vmatpush1.msra.mxu0 0.0
    %395 = vmatprep.subr.mxu0 0.0
    %396 = vmatpush1.msra.mxu0 0.0
    %397 = vmatprep.subr.mxu0 0.0
    %398 = vmatpush1.msra.mxu0 0.0
    %399 = vmatprep.subr.mxu0 0.0
    %400 = vmatpush1.msra.mxu0 0.0
    %401 = vmatprep.subr.mxu0 0.0
    %402 = vmatpush1.msra.mxu0 0.0
    %403 = vmatprep.subr.mxu0 0.0
    %404 = vmatpush1.msra.mxu0 0.0
    %405 = vmatprep.subr.mxu0 0.0
    %406 = vmatpush1.msra.mxu0 0.0
    %407 = vmatprep.subr.mxu0 0.0
    %408 = vmatpush1.msra.mxu0 0.0
    %409 = vmatprep.subr.mxu0 0.0
    %410 = vmatpush1.msra.mxu0 0.0
    %411 = vmatprep.subr.mxu0 0.0
    %412 = vmatpush1.msra.mxu0 0.0
    %413 = vmatprep.subr.mxu0 0.0
    %414 = vmatpush1.msra.mxu0 0.0
    %415 = vmatprep.subr.mxu0 0.0
    %416 = vmatpush1.msra.mxu0 %v128
    %417 = vmatprep.subr.mxu0 0.0
    %418 = vmatpush1.msra.mxu0 %v127
    %419 = vmatprep.subr.mxu0 0.0
    %420 = vmatpush2.msra.mxu0 0.0
    %421 = vmatprep.subr.mxu0 0.0
    %422 = vmatpush2.msra.mxu0 0.0
    %423 = vmatprep.subr.mxu0 0.0
    %424 = vmatpush2.msra.mxu0 0.0
    %425 = vmatprep.subr.mxu0 0.0
    %426 = vmatpush2.msra.mxu0 0.0
    %427 = vmatprep.subr.mxu0 0.0
    %428 = vmatpush2.msra.mxu0 0.0
    %429 = vmatprep.subr.mxu0 0.0
    %430 = vmatpush2.msra.mxu0 0.0
    %431 = vmatprep.subr.mxu0 0.0
    %432 = vmatpush2.msra.mxu0 0.0
    %433 = vmatprep.subr.mxu0 0.0
    %434 = vmatpush2.msra.mxu0 0.0
    %435 = vmatprep.subr.mxu0 0.0
    %436 = vmatpush2.msra.mxu0 0.0
    %437 = vmatprep.subr.mxu0 0.0
    %438 = vmatpush2.msra.mxu0 0.0
    %439 = vmatprep.subr.mxu0 0.0
    %440 = vmatpush2.msra.mxu0 0.0
    %441 = vmatprep.subr.mxu0 0.0
    %442 = vmatpush2.msra.mxu0 0.0
    %443 = vmatprep.subr.mxu0 0.0
    %444 = vmatpush2.msra.mxu0 0.0
    %445 = vmatprep.subr.mxu0 0.0
    %446 = vmatpush2.msra.mxu0 0.0
    %447 = vmatprep.subr.mxu0 0.0
    %448 = vmatpush2.msra.mxu0 0.0
    %449 = vmatprep.subr.mxu0 0.0
    %450 = vmatpush2.msra.mxu0 0.0
    %451 = vmatprep.mubr.f32.mxu0 0.0
    %452 = vmatmul.mubr.f32.gmra.mxu0 %v382
    %v453 = vpop.f32.mrf.mxu0
    %v454 = vadd.f32 0.0, %v453
    %v455 = vpop.f32.mrf.mxu0
    %456 = vmatprep.mubr.f32.mxu0 0.0
    %457 = vmatmul.mubr.f32.gmra.mxu0 %v385
    %v458 = vpop.f32.mrf.mxu0
    %v459 = vadd.f32 0.0, %v458
    %v460 = vpop.f32.mrf.mxu0
    %461 = vdwg.mxu0
    %v462 = vmul.f32 %v211, %v84
    %v463 = vmul.f32 %v216, %v89
    %v464 = vmul.f32 %v292, %v94
    %v465 = vmul.f32 %v297, %v99
    %v466 = vmul.f32 %v373, %v104
    %v467 = vmul.f32 %v378, %v109
    %v468 = vmul.f32 %v454, %v114
    %v469 = vmul.f32 %v459, %v119
    %v470 = vld [vmem:[#allocation5] sm:$0xff]
    %v471 = vld [vmem:[#allocation5 + $0x8] sm:$0xff]
    %v472 = vld [vmem:[#allocation5 + $0x10] sm:$0xff]
    %v473 = vld [vmem:[#allocation5 + $0x18] sm:$0xff]
    %v474 = vld [vmem:[#allocation7] sm:$0xff]
    %v475 = vld [vmem:[#allocation7 + $0x8] sm:$0xff]
    %v476 = vld [vmem:[#allocation7 + $0x10] sm:$0xff]
    %v477 = vld [vmem:[#allocation7 + $0x18] sm:$0xff]
    %vm478 = vcmask 261120
    %v480 = vsel %vm478, %v65, 0
    %v483 = vsel %vm478, %v66, 0
    %v486 = vsel %vm478, %v67, 0
    %v489 = vsel %vm478, %v68, 0
    %v492 = vsel %vm478, %v69, 0
    %v495 = vsel %vm478, %v70, 0
    %v498 = vsel %vm478, %v71, 0
    %v501 = vsel %vm478, %v72, 0
    %503 = vmatprep.subr.mxu0 0.0
    %504 = vmatpush1.msra.mxu0 0.0
    %505 = vmatprep.subr.mxu0 0.0
    %506 = vmatpush1.msra.mxu0 0.0
    %507 = vmatprep.subr.mxu0 0.0
    %508 = vmatpush1.msra.mxu0 0.0
    %509 = vmatprep.subr.mxu0 0.0
    %510 = vmatpush1.msra.mxu0 0.0
    %511 = vmatprep.subr.mxu0 0.0
    %512 = vmatpush1.msra.mxu0 0.0
    %513 = vmatprep.subr.mxu0 0.0
    %514 = vmatpush1.msra.mxu0 0.0
    %515 = vmatprep.subr.mxu0 0.0
    %516 = vmatpush1.msra.mxu0 0.0
    %517 = vmatprep.subr.mxu0 0.0
    %518 = vmatpush1.msra.mxu0 0.0
    %519 = vmatprep.subr.mxu0 0.0
    %520 = vmatpush1.msra.mxu0 0.0
    %521 = vmatprep.subr.mxu0 0.0
    %522 = vmatpush1.msra.mxu0 0.0
    %523 = vmatprep.subr.mxu0 0.0
    %524 = vmatpush1.msra.mxu0 0.0
    %525 = vmatprep.subr.mxu0 0.0
    %526 = vmatpush1.msra.mxu0 0.0
    %527 = vmatprep.subr.mxu0 0.0
    %528 = vmatpush1.msra.mxu0 %v477
    %529 = vmatprep.subr.mxu0 0.0
    %530 = vmatpush1.msra.mxu0 %v476
    %531 = vmatprep.subr.mxu0 0.0
    %532 = vmatpush1.msra.mxu0 %v475
    %533 = vmatprep.subr.mxu0 0.0
    %534 = vmatpush1.msra.mxu0 %v474
    %535 = vmatprep.subr.mxu0 0.0
    %536 = vmatpush2.msra.mxu0 0.0
    %537 = vmatprep.subr.mxu0 0.0
    %538 = vmatpush2.msra.mxu0 0.0
    %539 = vmatprep.subr.mxu0 0.0
    %540 = vmatpush2.msra.mxu0 0.0
    %541 = vmatprep.subr.mxu0 0.0
    %542 = vmatpush2.msra.mxu0 0.0
    %543 = vmatprep.subr.mxu0 0.0
    %544 = vmatpush2.msra.mxu0 0.0
    %545 = vmatprep.subr.mxu0 0.0
    %546 = vmatpush2.msra.mxu0 0.0
    %547 = vmatprep.subr.mxu0 0.0
    %548 = vmatpush2.msra.mxu0 0.0
    %549 = vmatprep.subr.mxu0 0.0
    %550 = vmatpush2.msra.mxu0 0.0
    %551 = vmatprep.subr.mxu0 0.0
    %552 = vmatpush2.msra.mxu0 0.0
    %553 = vmatprep.subr.mxu0 0.0
    %554 = vmatpush2.msra.mxu0 0.0
    %555 = vmatprep.subr.mxu0 0.0
    %556 = vmatpush2.msra.mxu0 0.0
    %557 = vmatprep.subr.mxu0 0.0
    %558 = vmatpush2.msra.mxu0 0.0
    %559 = vmatprep.subr.mxu0 0.0
    %560 = vmatpush2.msra.mxu0 0.0
    %561 = vmatprep.subr.mxu0 0.0
    %562 = vmatpush2.msra.mxu0 0.0
    %563 = vmatprep.subr.mxu0 0.0
    %564 = vmatpush2.msra.mxu0 0.0
    %565 = vmatprep.subr.mxu0 0.0
    %566 = vmatpush2.msra.mxu0 0.0
    %567 = vmatprep.mubr.f32.mxu0 0.0
    %568 = vmatmul.mubr.f32.gmra.mxu0 %v480
    %v569 = vpop.f32.mrf.mxu0
    %v570 = vadd.f32 0.0, %v569
    %v571 = vpop.f32.mrf.mxu0
    %572 = vmatprep.mubr.f32.mxu0 0.0
    %573 = vmatmul.mubr.f32.gmra.mxu0 %v483
    %v574 = vpop.f32.mrf.mxu0
    %v575 = vadd.f32 0.0, %v574
    %v576 = vpop.f32.mrf.mxu0
    %577 = vmatprep.mubr.f32.mxu0 0.0
    %578 = vmatmul.mubr.f32.gmra.mxu0 %v486
    %v579 = vpop.f32.mrf.mxu0
    %v580 = vadd.f32 0.0, %v579
    %v581 = vpop.f32.mrf.mxu0
    %582 = vmatprep.mubr.f32.mxu0 0.0
    %583 = vmatmul.mubr.f32.gmra.mxu0 %v489
    %v584 = vpop.f32.mrf.mxu0
    %v585 = vadd.f32 0.0, %v584
    %v586 = vpop.f32.mrf.mxu0
    %587 = vmatprep.mubr.f32.mxu0 0.0
    %588 = vmatmul.mubr.f32.gmra.mxu0 %v492
    %v589 = vpop.f32.mrf.mxu0
    %v590 = vadd.f32 0.0, %v589
    %v591 = vpop.f32.mrf.mxu0
    %592 = vmatprep.mubr.f32.mxu0 0.0
    %593 = vmatmul.mubr.f32.gmra.mxu0 %v495
    %v594 = vpop.f32.mrf.mxu0
    %v595 = vadd.f32 0.0, %v594
    %v596 = vpop.f32.mrf.mxu0
    %597 = vmatprep.mubr.f32.mxu0 0.0
    %598 = vmatmul.mubr.f32.gmra.mxu0 %v498
    %v599 = vpop.f32.mrf.mxu0
    %v600 = vadd.f32 0.0, %v599
    %v601 = vpop.f32.mrf.mxu0
    %602 = vmatprep.mubr.f32.mxu0 0.0
    %603 = vmatmul.mubr.f32.gmra.mxu0 %v501
    %v604 = vpop.f32.mrf.mxu0
    %v605 = vadd.f32 0.0, %v604
    %v606 = vpop.f32.mrf.mxu0
    %607 = vdwg.mxu0
    %v609 = vsel %vm478, %v462, 0
    %v612 = vsel %vm478, %v463, 0
    %v615 = vsel %vm478, %v464, 0
    %v618 = vsel %vm478, %v465, 0
    %v621 = vsel %vm478, %v466, 0
    %v624 = vsel %vm478, %v467, 0
    %v627 = vsel %vm478, %v468, 0
    %v630 = vsel %vm478, %v469, 0
    %632 = vmatprep.subr.mxu0 0.0
    %633 = vmatpush1.msra.mxu0 0.0
    %634 = vmatprep.subr.mxu0 0.0
    %635 = vmatpush1.msra.mxu0 0.0
    %636 = vmatprep.subr.mxu0 0.0
    %637 = vmatpush1.msra.mxu0 0.0
    %638 = vmatprep.subr.mxu0 0.0
    %639 = vmatpush1.msra.mxu0 0.0
    %640 = vmatprep.subr.mxu0 0.0
    %641 = vmatpush1.msra.mxu0 0.0
    %642 = vmatprep.subr.mxu0 0.0
    %643 = vmatpush1.msra.mxu0 0.0
    %644 = vmatprep.subr.mxu0 0.0
    %645 = vmatpush1.msra.mxu0 0.0
    %646 = vmatprep.subr.mxu0 0.0
    %647 = vmatpush1.msra.mxu0 0.0
    %648 = vmatprep.subr.mxu0 0.0
    %649 = vmatpush1.msra.mxu0 0.0
    %650 = vmatprep.subr.mxu0 0.0
    %651 = vmatpush1.msra.mxu0 0.0
    %652 = vmatprep.subr.mxu0 0.0
    %653 = vmatpush1.msra.mxu0 0.0
    %654 = vmatprep.subr.mxu0 0.0
    %655 = vmatpush1.msra.mxu0 0.0
    %656 = vmatprep.subr.mxu0 0.0
    %657 = vmatpush1.msra.mxu0 %v473
    %658 = vmatprep.subr.mxu0 0.0
    %659 = vmatpush1.msra.mxu0 %v472
    %660 = vmatprep.subr.mxu0 0.0
    %661 = vmatpush1.msra.mxu0 %v471
    %662 = vmatprep.subr.mxu0 0.0
    %663 = vmatpush1.msra.mxu0 %v470
    %664 = vmatprep.subr.mxu0 0.0
    %665 = vmatpush2.msra.mxu0 0.0
    %666 = vmatprep.subr.mxu0 0.0
    %667 = vmatpush2.msra.mxu0 0.0
    %668 = vmatprep.subr.mxu0 0.0
    %669 = vmatpush2.msra.mxu0 0.0
    %670 = vmatprep.subr.mxu0 0.0
    %671 = vmatpush2.msra.mxu0 0.0
    %672 = vmatprep.subr.mxu0 0.0
    %673 = vmatpush2.msra.mxu0 0.0
    %674 = vmatprep.subr.mxu0 0.0
    %675 = vmatpush2.msra.mxu0 0.0
    %676 = vmatprep.subr.mxu0 0.0
    %677 = vmatpush2.msra.mxu0 0.0
    %678 = vmatprep.subr.mxu0 0.0
    %679 = vmatpush2.msra.mxu0 0.0
    %680 = vmatprep.subr.mxu0 0.0
    %681 = vmatpush2.msra.mxu0 0.0
    %682 = vmatprep.subr.mxu0 0.0
    %683 = vmatpush2.msra.mxu0 0.0
    %684 = vmatprep.subr.mxu0 0.0
    %685 = vmatpush2.msra.mxu0 0.0
    %686 = vmatprep.subr.mxu0 0.0
    %687 = vmatpush2.msra.mxu0 0.0
    %688 = vmatprep.subr.mxu0 0.0
    %689 = vmatpush2.msra.mxu0 0.0
    %690 = vmatprep.subr.mxu0 0.0
    %691 = vmatpush2.msra.mxu0 0.0
    %692 = vmatprep.subr.mxu0 0.0
    %693 = vmatpush2.msra.mxu0 0.0
    %694 = vmatprep.subr.mxu0 0.0
    %695 = vmatpush2.msra.mxu0 0.0
    %696 = vmatprep.mubr.f32.mxu0 0.0
    %697 = vmatmul.mubr.f32.gmra.mxu0 %v609
    %v698 = vpop.f32.mrf.mxu0
    %v699 = vadd.f32 %v570, %v698
    %v700 = vpop.f32.mrf.mxu0
    %701 = vmatprep.mubr.f32.mxu0 0.0
    %702 = vmatmul.mubr.f32.gmra.mxu0 %v612
    %v703 = vpop.f32.mrf.mxu0
    %v704 = vadd.f32 %v575, %v703
    %v705 = vpop.f32.mrf.mxu0
    %706 = vmatprep.mubr.f32.mxu0 0.0
    %707 = vmatmul.mubr.f32.gmra.mxu0 %v615
    %v708 = vpop.f32.mrf.mxu0
    %v709 = vadd.f32 %v580, %v708
    %v710 = vpop.f32.mrf.mxu0
    %711 = vmatprep.mubr.f32.mxu0 0.0
    %712 = vmatmul.mubr.f32.gmra.mxu0 %v618
    %v713 = vpop.f32.mrf.mxu0
    %v714 = vadd.f32 %v585, %v713
    %v715 = vpop.f32.mrf.mxu0
    %716 = vmatprep.mubr.f32.mxu0 0.0
    %717 = vmatmul.mubr.f32.gmra.mxu0 %v621
    %v718 = vpop.f32.mrf.mxu0
    %v719 = vadd.f32 %v590, %v718
    %v720 = vpop.f32.mrf.mxu0
    %721 = vmatprep.mubr.f32.mxu0 0.0
    %722 = vmatmul.mubr.f32.gmra.mxu0 %v624
    %v723 = vpop.f32.mrf.mxu0
    %v724 = vadd.f32 %v595, %v723
    %v725 = vpop.f32.mrf.mxu0
    %726 = vmatprep.mubr.f32.mxu0 0.0
    %727 = vmatmul.mubr.f32.gmra.mxu0 %v627
    %v728 = vpop.f32.mrf.mxu0
    %v729 = vadd.f32 %v600, %v728
    %v730 = vpop.f32.mrf.mxu0
    %731 = vmatprep.mubr.f32.mxu0 0.0
    %732 = vmatmul.mubr.f32.gmra.mxu0 %v630
    %v733 = vpop.f32.mrf.mxu0
    %v734 = vadd.f32 %v605, %v733
    %v735 = vpop.f32.mrf.mxu0
    %736 = vdwg.mxu0
    %v737 = vld [vmem:[%s5] sm:$0x1]
    %v739 = vlaneseq
    %v740 = vshrl.u32 %v739, 7
    %v741 = vsub.s32 0, %v740
    %v742 = vrot.slane %v737, %v741
    %v744 = vadd.f32 %v699, %v742
    %v745 = vadd.f32 %v704, %v742
    %v746 = vadd.f32 %v709, %v742
    %v747 = vadd.f32 %v714, %v742
    %v748 = vadd.f32 %v719, %v742
    %v749 = vadd.f32 %v724, %v742
    %v750 = vadd.f32 %v729, %v742
    %v751 = vadd.f32 %v734, %v742
    %752 = vst.msk [vmem:[#allocation8] sm:$0xff] %vm478, %v744
    %753 = vst.msk [vmem:[#allocation8 + $0x8] sm:$0xff] %vm478, %v745
    %756 = vrot.lane.b32.xlu0 %v746, 32
    %v757 = vpop.permute.xlu0 %756
    %758 = vrot.lane.b32.xlu0 %v747, 32
    %v759 = vpop.permute.xlu0 %758
    %vm762 = vcmask 523520
    %763 = vst.msk [vmem:[#allocation8] sm:$0xff] %vm762, %v757
    %764 = vst.msk [vmem:[#allocation8 + $0x8] sm:$0xff] %vm762, %v759
    %767 = vrot.lane.b32.xlu0 %v748, 64
    %v768 = vpop.permute.xlu0 %767
    %769 = vrot.lane.b32.xlu0 %v749, 64
    %v770 = vpop.permute.xlu0 %769
    %vm773 = vcmask 785920
    %774 = vst.msk [vmem:[#allocation8] sm:$0xff] %vm773, %v768
    %775 = vst.msk [vmem:[#allocation8 + $0x8] sm:$0xff] %vm773, %v770
    %778 = vrot.lane.b32.xlu0 %v750, 96
    %v779 = vpop.permute.xlu0 %778
    %780 = vrot.lane.b32.xlu0 %v751, 96
    %v781 = vpop.permute.xlu0 %780
    %vm784 = vcmask 1048320
    %785 = vst.msk [vmem:[#allocation8] sm:$0xff] %vm784, %v779
    %786 = vst.msk [vmem:[#allocation8 + $0x8] sm:$0xff] %vm784, %v781
    // Predicated region
    $region38: #{tpu_custom_call.1} parent=1 // pred_check
      _
    $region39: #{tpu_custom_call.1} parent=1 // pred_check_branch
      %788 = sbr.rel (0) target = $region41
    $region40: #{tpu_custom_call.1} parent=1 // pred_region
      %s790 = ssub.s32 256, 256
      %791 = vsyncadd [#allocation4], %s790
      %s792 = sshll.u32 [#allocation8], 4
      %s793 = int_to_ptr.vmem [resolvable:$true] %s792
      %798 = dma.vmem_to_hbm [thread:$0]  %s793, 256, %s6, [#allocation4], 128, 128, 8
    $region41: #{tpu_custom_call.1} parent=1 // pred_fallthru
      _
    // Predicated region
    $region42: #{tpu_custom_call.1} parent=1 // pred_check
      _
    $region43: #{tpu_custom_call.1} parent=1 // pred_check_branch
      %800 = sbr.rel (0) target = $region45
    $region44: #{tpu_custom_call.1} parent=1 // pred_region
      %801 = dma.done [#allocation4], 256
    $region45: #{tpu_custom_call.1} parent=1 // pred_fallthru
      _
    %802 = vsyncpa [#allocation3], 1
    %803 = vsyncpa [#allocation6], 1
    %804 = vsyncpa [#allocation4], 1

</llo_original>
